<compile_context>
chip_gen: v6e
topology: v6e:2x2x1
jax: 0.10.0
libtpu: 0.0.40
codegen_flags: <defaults>
</compile_context>

<pallas_src>
import numpy as np
import jax
import jax.numpy as jnp
from jax import lax
from jax.experimental import pallas as pl
from jax.experimental.pallas import tpu as pltpu


# ----------------------------------------------------------------------------
# Deterministic parameter construction (mirrors STFT.__init__)
# ----------------------------------------------------------------------------
def _hann_periodic(win_length):
    n = np.arange(win_length)
    return 0.5 - 0.5 * np.cos(2.0 * np.pi * n / win_length)


def _pad_center(w, size):
    lpad = (size - len(w)) // 2
    return np.pad(w, (lpad, size - len(w) - lpad))


def _round_up(x, m):
    return ((x + m - 1) // m) * m


def make_stft_setup(filter_length, hop_length, win_length, num_samples):
    K, hop = filter_length, hop_length
    C = K // 2 + 1
    scale = K / hop

    fourier_basis = np.fft.fft(np.eye(K))
    fourier_basis = np.vstack(
        [np.real(fourier_basis[:C, :]), np.imag(fourier_basis[:C, :])]
    )  # (2C, K)

    forward_basis = fourier_basis.copy()                       # (2C, K)
    inverse_basis = np.linalg.pinv(scale * fourier_basis).T    # (2C, K)

    fft_window = _pad_center(_hann_periodic(win_length), K)    # (K,)
    forward_basis = forward_basis * fft_window[None, :]
    inverse_basis = inverse_basis * fft_window[None, :]

    pad = K // 2
    n_frames = (num_samples + 2 * pad - K) // hop + 1
    r = -(-K // hop)                 # ceil(K / hop) shifted adds for overlap-add
    Kp = r * hop                     # inverse frame length padded to a hop multiple
    R = n_frames + r - 1             # accumulator rows
    L_acc = R * hop                  # accumulator length (>= true conv_transpose len)
    L_true = (n_frames - 1) * hop + K

    # Lane-padded, concatenated bases (real half at lanes [0,C), imag half at
    # lanes [Cp, Cp+C), zeros elsewhere so the padded lanes contribute nothing).
    Cp = _round_up(C, 128)
    fwd_cat = np.zeros((K, 2 * Cp), np.float32)
    fwd_cat[:, :C] = forward_basis[:C, :].T
    fwd_cat[:, Cp:Cp + C] = forward_basis[C:, :].T
    inv_cat = np.zeros((2 * Cp, Kp), np.float32)
    inv_cat[:C, :K] = inverse_basis[:C, :]
    inv_cat[Cp:Cp + C, :K] = inverse_basis[C:, :]

    # window_sumsquare (librosa-style); fold the K/hop scale and the
    # "only divide where > tiny" rule into a single (R, hop) normalization map.
    win_sq = _pad_center(_hann_periodic(win_length) ** 2, K).astype(np.float32)
    window_sum = np.zeros(L_acc, dtype=np.float32)
    for f in range(n_frames):
        window_sum[f * hop:f * hop + K] += win_sq
    tiny = np.finfo(np.float32).tiny
    norm = np.where(window_sum > tiny,
                    np.float32(scale) / window_sum,
                    np.float32(scale)).astype(np.float32)

    return dict(
        filter_length=K, hop_length=hop, cutoff=C, cutoff_pad=Cp,
        pad=pad, n_frames=n_frames, r=r, acc_rows=R,
        full_len_true=L_true,
        fwd_cat=jnp.asarray(fwd_cat),                 # (K, 2Cp)
        inv_cat=jnp.asarray(inv_cat),                 # (2Cp, Kp)
        norm=jnp.asarray(norm.reshape(R, hop)),       # (R, hop)
    )


# ----------------------------------------------------------------------------
# Fused kernel: frames -> spectrum (+magnitude) -> inverse frames ->
#               overlap-add -> window-sum normalization
# ----------------------------------------------------------------------------
def _make_fused_kernel(n_frames, r, hop, cutoff_pad):
    Cp = cutoff_pad

    def kernel(frames_ref, fwd_ref, inv_ref, norm_ref,
               spec_ref, mag_ref, out_ref, acc_ref):
        frames = frames_ref[0]                                            # (nF, K)

        # forward transform: one MXU pass against the [real | imag] basis.
        spec = jnp.dot(frames, fwd_ref[...],
                       preferred_element_type=jnp.float32)                # (nF, 2Cp)
        spec_ref[0] = spec

        real = spec[:, :Cp]
        imag = spec[:, Cp:]
        mag_ref[0] = jnp.sqrt(real * real + imag * imag)                  # (nF, Cp)

        # inverse transform: mag*cos(phase) == real and mag*sin(phase) == imag,
        # so the recombined spectrum is exactly `spec`; one MXU pass against the
        # stacked [inv_real ; inv_imag] basis gives the per-frame contributions.
        contrib = jnp.dot(spec, inv_ref[...],
                          preferred_element_type=jnp.float32)             # (nF, Kp)

        # overlap-add (== conv_transpose1d stride=hop): r = ceil(K/hop) static
        # shifted adds into a VMEM accumulator laid out as (R, hop) rows.
        acc_ref[...] = jnp.zeros_like(acc_ref)
        for j in range(r):
            sl = pl.ds(j, n_frames)
            acc_ref[sl, :] = acc_ref[sl, :] + contrib[:, j * hop:(j + 1) * hop]

        out_ref[0] = acc_ref[...] * norm_ref[...]                         # (R, hop)

    return kernel


# ----------------------------------------------------------------------------
# Forward wrapper (== STFT.forward: transform + inverse)
# ----------------------------------------------------------------------------
def stft_forward(x, setup):
    K = setup['filter_length']
    hop = setup['hop_length']
    C = setup['cutoff']
    Cp = setup['cutoff_pad']
    pad = setup['pad']
    nF = setup['n_frames']
    r = setup['r']
    R = setup['acc_rows']
    Kp = r * hop
    L_true = setup['full_len_true']
    B, T = x.shape

    # reflect pad + framing (glue)
    padded = jnp.pad(x, ((0, 0), (pad, pad)), mode='reflect')             # (B, T+K)
    idx = np.arange(nF)[:, None] * hop + np.arange(K)[None, :]            # (nF, K)
    frames = padded[:, idx]                                               # (B, nF, K)

    kernel = _make_fused_kernel(nF, r, hop, Cp)
    spec, mag_p, inv = pl.pallas_call(
        kernel,
        grid=(B,),
        in_specs=[pl.BlockSpec((1, nF, K), lambda b: (b, 0, 0)),
                  pl.BlockSpec((K, 2 * Cp), lambda b: (0, 0)),
                  pl.BlockSpec((2 * Cp, Kp), lambda b: (0, 0)),
                  pl.BlockSpec((R, hop), lambda b: (0, 0))],
        out_specs=[pl.BlockSpec((1, nF, 2 * Cp), lambda b: (b, 0, 0)),
                   pl.BlockSpec((1, nF, Cp), lambda b: (b, 0, 0)),
                   pl.BlockSpec((1, R, hop), lambda b: (b, 0, 0))],
        out_shape=[jax.ShapeDtypeStruct((B, nF, 2 * Cp), jnp.float32),
                   jax.ShapeDtypeStruct((B, nF, Cp), jnp.float32),
                   jax.ShapeDtypeStruct((B, R, hop), jnp.float32)],
        scratch_shapes=[pltpu.VMEM((R, hop), jnp.float32)],
        compiler_params=pltpu.CompilerParams(
            dimension_semantics=("parallel",)),
    )(frames, setup['fwd_cat'], setup['inv_cat'], setup['norm'])

    # crop lane padding; phase trig only in glue (only the returned phase needs it)
    real = spec[:, :, :C]
    imag = spec[:, :, Cp:Cp + C]
    mag = mag_p[:, :, :C]
    phase = jnp.arctan2(imag, real)

    inv_flat = inv.reshape(B, R * hop)
    reconstruction = inv_flat[:, pad:L_true - pad][:, None, :]            # (B, 1, T)
    return reconstruction, mag, phase


# ----------------------------------------------------------------------------
# Pure-JAX reference mirroring the original PyTorch math (with the trig
# round-trip) for a sanity check
# ----------------------------------------------------------------------------
def reference_forward(x, setup):
    K = setup['filter_length']; hop = setup['hop_length']
    C = setup['cutoff']; Cp = setup['cutoff_pad']
    pad = setup['pad']; nF = setup['n_frames']
    L = setup['full_len_true']
    B, T = x.shape

    padded = jnp.pad(x, ((0, 0), (pad, pad)), mode='reflect')
    idx = np.arange(nF)[:, None] * hop + np.arange(K)[None, :]
    frames = padded[:, idx]                                               # (B, nF, K)

    fwd = setup['fwd_cat']
    inv = setup['inv_cat']
    real = frames @ fwd[:, :C]
    imag = frames @ fwd[:, Cp:Cp + C]
    mag = jnp.sqrt(real * real + imag * imag)
    phase = jnp.arctan2(imag, real)
    re = mag * jnp.cos(phase)
    im = mag * jnp.sin(phase)
    contrib = re @ inv[:C, :K] + im @ inv[Cp:Cp + C, :K]                  # (B, nF, K)

    acc = jnp.zeros((B, L), jnp.float32)
    for f in range(nF):
        acc = acc.at[:, f * hop:f * hop + K].add(contrib[:, f, :])
    norm_flat = setup['norm'].reshape(-1)[:L]
    acc = acc * norm_flat[None, :]
    return acc[:, pad:L - pad][:, None, :], mag, phase


if __name__ == "__main__":
    filter_length, hop_length, win_length = 16, 4, 16
    B, T = 2, 64

    key = jax.random.PRNGKey(0)
    x = jax.random.normal(key, (B, T), dtype=jnp.float32)

    setup = make_stft_setup(filter_length, hop_length, win_length, T)

    recon, mag, phase = stft_forward(x, setup)
    recon = jax.block_until_ready(recon)

    ref_recon, ref_mag, ref_phase = reference_forward(x, setup)
    assert recon.shape == (B, 1, T), recon.shape
    np.testing.assert_allclose(np.asarray(recon), np.asarray(ref_recon),
                               rtol=1e-3, atol=1e-3)
    np.testing.assert_allclose(np.asarray(mag), np.asarray(ref_mag),
                               rtol=1e-3, atol=1e-3)

    print("KERNEL_OK")
</pallas_src>

<mosaic_0001>
module attributes {stable_mosaic.version = 11 : i64} {
  func.func @kernel(%arg0: i32, %arg1: memref<1x17x16xf32, #tpu.memory_space<vmem>>, %arg2: memref<16x256xf32, #tpu.memory_space<vmem>>, %arg3: memref<256x16xf32, #tpu.memory_space<vmem>>, %arg4: memref<20x4xf32, #tpu.memory_space<vmem>>, %arg5: memref<1x17x256xf32, #tpu.memory_space<vmem>>, %arg6: memref<1x17x128xf32, #tpu.memory_space<vmem>>, %arg7: memref<1x20x4xf32, #tpu.memory_space<vmem>>, %arg8: memref<20x4xf32, #tpu.memory_space<vmem>>) attributes {dimension_semantics = [#tpu.dimension_semantics<parallel>], iteration_bounds = array<i64: 2>, scalar_prefetch = 0 : i64, scratch_operands = 1 : i64, tpu.core_type = #tpu.core_type<tc>, window_params = [{transform_indices = @transform_0, window_bounds = array<i64: 1, 17, 16>}, {pipeline_mode = #tpu.pipeline_mode<synchronous>, transform_indices = @transform_1, window_bounds = array<i64: 16, 256>}, {pipeline_mode = #tpu.pipeline_mode<synchronous>, transform_indices = @transform_2, window_bounds = array<i64: 256, 16>}, {pipeline_mode = #tpu.pipeline_mode<synchronous>, transform_indices = @transform_3, window_bounds = array<i64: 20, 4>}, {transform_indices = @transform_4, window_bounds = array<i64: 1, 17, 256>}, {transform_indices = @transform_5, window_bounds = array<i64: 1, 17, 128>}, {transform_indices = @transform_6, window_bounds = array<i64: 1, 20, 4>}]} {
    %c0 = arith.constant 0 : index
    %c0_0 = arith.constant 0 : index
    %c0_1 = arith.constant 0 : index
    %0 = vector.load %arg1[%c0, %c0_0, %c0_1] : memref<1x17x16xf32, #tpu.memory_space<vmem>>, vector<1x17x16xf32>
    %1 = vector.shape_cast %0 : vector<1x17x16xf32> to vector<17x16xf32>
    %c0_2 = arith.constant 0 : index
    %c0_3 = arith.constant 0 : index
    %2 = vector.load %arg2[%c0_2, %c0_3] : memref<16x256xf32, #tpu.memory_space<vmem>>, vector<16x256xf32>
    %cst = arith.constant dense<0.000000e+00> : vector<17x256xf32>
    %3 = tpu.matmul %1, %2, %cst {dimension_numbers = #tpu.dot_dimension_numbers<[1], [0], [0], [1], [0, 0, 1, 1], [], []>} : vector<17x16xf32>, vector<16x256xf32>, vector<17x256xf32> -> vector<17x256xf32>
    %c0_4 = arith.constant 0 : index
    %c0_5 = arith.constant 0 : index
    %c0_6 = arith.constant 0 : index
    %4 = vector.load %arg5[%c0_4, %c0_5, %c0_6] : memref<1x17x256xf32, #tpu.memory_space<vmem>>, vector<1x17x256xf32>
    %5 = vector.shape_cast %4 : vector<1x17x256xf32> to vector<17x256xf32>
    %6 = vector.shape_cast %3 : vector<17x256xf32> to vector<1x17x256xf32>
    tpu.vector_store %arg5[%c0_4, %c0_5, %c0_6], %6 {strides = array<i32>} : memref<1x17x256xf32, #tpu.memory_space<vmem>>, vector<1x17x256xf32>,
    %7 = vector.extract_strided_slice %3 {offsets = [0, 0], sizes = [17, 128], strides = [1, 1]} : vector<17x256xf32> to vector<17x128xf32>
    %8 = vector.extract_strided_slice %3 {offsets = [0, 128], sizes = [17, 128], strides = [1, 1]} : vector<17x256xf32> to vector<17x128xf32>
    %9 = arith.mulf %7, %7 : vector<17x128xf32>
    %10 = arith.mulf %8, %8 : vector<17x128xf32>
    %11 = arith.addf %9, %10 : vector<17x128xf32>
    %12 = math.sqrt %11 : vector<17x128xf32>
    %c0_7 = arith.constant 0 : index
    %c0_8 = arith.constant 0 : index
    %c0_9 = arith.constant 0 : index
    %13 = vector.load %arg6[%c0_7, %c0_8, %c0_9] : memref<1x17x128xf32, #tpu.memory_space<vmem>>, vector<1x17x128xf32>
    %14 = vector.shape_cast %13 : vector<1x17x128xf32> to vector<17x128xf32>
    %15 = vector.shape_cast %12 : vector<17x128xf32> to vector<1x17x128xf32>
    tpu.vector_store %arg6[%c0_7, %c0_8, %c0_9], %15 {strides = array<i32>} : memref<1x17x128xf32, #tpu.memory_space<vmem>>, vector<1x17x128xf32>,
    %c0_10 = arith.constant 0 : index
    %c0_11 = arith.constant 0 : index
    %16 = vector.load %arg3[%c0_10, %c0_11] : memref<256x16xf32, #tpu.memory_space<vmem>>, vector<256x16xf32>
    %cst_12 = arith.constant dense<0.000000e+00> : vector<17x16xf32>
    %17 = tpu.matmul %3, %16, %cst_12 {dimension_numbers = #tpu.dot_dimension_numbers<[1], [0], [0], [1], [0, 0, 1, 1], [], []>} : vector<17x256xf32>, vector<256x16xf32>, vector<17x16xf32> -> vector<17x16xf32>
    %cst_13 = arith.constant 0.000000e+00 : f32
    %18 = vector.broadcast %cst_13 : f32 to vector<20x4xf32>
    %c0_14 = arith.constant 0 : index
    %c0_15 = arith.constant 0 : index
    %19 = vector.load %arg8[%c0_14, %c0_15] : memref<20x4xf32, #tpu.memory_space<vmem>>, vector<20x4xf32>
    tpu.vector_store %arg8[%c0_14, %c0_15], %18 {strides = array<i32>} : memref<20x4xf32, #tpu.memory_space<vmem>>, vector<20x4xf32>,
    %c0_16 = arith.constant 0 : index
    %c0_17 = arith.constant 0 : index
    %20 = vector.load %arg8[%c0_16, %c0_17] : memref<20x4xf32, #tpu.memory_space<vmem>>, vector<17x4xf32>
    %21 = vector.extract_strided_slice %17 {offsets = [0, 0], sizes = [17, 4], strides = [1, 1]} : vector<17x16xf32> to vector<17x4xf32>
    %22 = arith.addf %20, %21 : vector<17x4xf32>
    %c0_18 = arith.constant 0 : index
    %c0_19 = arith.constant 0 : index
    %23 = vector.load %arg8[%c0_18, %c0_19] : memref<20x4xf32, #tpu.memory_space<vmem>>, vector<17x4xf32>
    tpu.vector_store %arg8[%c0_18, %c0_19], %22 {strides = array<i32>} : memref<20x4xf32, #tpu.memory_space<vmem>>, vector<17x4xf32>,
    %c1 = arith.constant 1 : index
    %c0_20 = arith.constant 0 : index
    %24 = vector.load %arg8[%c1, %c0_20] : memref<20x4xf32, #tpu.memory_space<vmem>>, vector<17x4xf32>
    %25 = vector.extract_strided_slice %17 {offsets = [0, 4], sizes = [17, 4], strides = [1, 1]} : vector<17x16xf32> to vector<17x4xf32>
    %26 = arith.addf %24, %25 : vector<17x4xf32>
    %c1_21 = arith.constant 1 : index
    %c0_22 = arith.constant 0 : index
    %27 = vector.load %arg8[%c1_21, %c0_22] : memref<20x4xf32, #tpu.memory_space<vmem>>, vector<17x4xf32>
    tpu.vector_store %arg8[%c1_21, %c0_22], %26 {strides = array<i32>} : memref<20x4xf32, #tpu.memory_space<vmem>>, vector<17x4xf32>,
    %c2 = arith.constant 2 : index
    %c0_23 = arith.constant 0 : index
    %28 = vector.load %arg8[%c2, %c0_23] : memref<20x4xf32, #tpu.memory_space<vmem>>, vector<17x4xf32>
    %29 = vector.extract_strided_slice %17 {offsets = [0, 8], sizes = [17, 4], strides = [1, 1]} : vector<17x16xf32> to vector<17x4xf32>
    %30 = arith.addf %28, %29 : vector<17x4xf32>
    %c2_24 = arith.constant 2 : index
    %c0_25 = arith.constant 0 : index
    %31 = vector.load %arg8[%c2_24, %c0_25] : memref<20x4xf32, #tpu.memory_space<vmem>>, vector<17x4xf32>
    tpu.vector_store %arg8[%c2_24, %c0_25], %30 {strides = array<i32>} : memref<20x4xf32, #tpu.memory_space<vmem>>, vector<17x4xf32>,
    %c3 = arith.constant 3 : index
    %c0_26 = arith.constant 0 : index
    %32 = vector.load %arg8[%c3, %c0_26] : memref<20x4xf32, #tpu.memory_space<vmem>>, vector<17x4xf32>
    %33 = vector.extract_strided_slice %17 {offsets = [0, 12], sizes = [17, 4], strides = [1, 1]} : vector<17x16xf32> to vector<17x4xf32>
    %34 = arith.addf %32, %33 : vector<17x4xf32>
    %c3_27 = arith.constant 3 : index
    %c0_28 = arith.constant 0 : index
    %35 = vector.load %arg8[%c3_27, %c0_28] : memref<20x4xf32, #tpu.memory_space<vmem>>, vector<17x4xf32>
    tpu.vector_store %arg8[%c3_27, %c0_28], %34 {strides = array<i32>} : memref<20x4xf32, #tpu.memory_space<vmem>>, vector<17x4xf32>,
    %c0_29 = arith.constant 0 : index
    %c0_30 = arith.constant 0 : index
    %36 = vector.load %arg8[%c0_29, %c0_30] : memref<20x4xf32, #tpu.memory_space<vmem>>, vector<20x4xf32>
    %c0_31 = arith.constant 0 : index
    %c0_32 = arith.constant 0 : index
    %37 = vector.load %arg4[%c0_31, %c0_32] : memref<20x4xf32, #tpu.memory_space<vmem>>, vector<20x4xf32>
    %38 = arith.mulf %36, %37 : vector<20x4xf32>
    %c0_33 = arith.constant 0 : index
    %c0_34 = arith.constant 0 : index
    %c0_35 = arith.constant 0 : index
    %39 = vector.load %arg7[%c0_33, %c0_34, %c0_35] : memref<1x20x4xf32, #tpu.memory_space<vmem>>, vector<1x20x4xf32>
    %40 = vector.shape_cast %39 : vector<1x20x4xf32> to vector<20x4xf32>
    %41 = vector.shape_cast %38 : vector<20x4xf32> to vector<1x20x4xf32>
    tpu.vector_store %arg7[%c0_33, %c0_34, %c0_35], %41 {strides = array<i32>} : memref<1x20x4xf32, #tpu.memory_space<vmem>>, vector<1x20x4xf32>,
    return
  }
  func.func @transform_0(%arg0: i32) -> (i32, i32, i32) {
    %c0_i32 = arith.constant 0 : i32
    %c0_i32_0 = arith.constant 0 : i32
    %c0_i32_1 = arith.constant 0 : i32
    return %arg0, %c0_i32, %c0_i32_0 : i32, i32, i32
  }
  func.func @transform_1(%arg0: i32) -> (i32, i32) {
    %c0_i32 = arith.constant 0 : i32
    %c0_i32_0 = arith.constant 0 : i32
    %c0_i32_1 = arith.constant 0 : i32
    return %c0_i32, %c0_i32_0 : i32, i32
  }
  func.func @transform_2(%arg0: i32) -> (i32, i32) {
    %c0_i32 = arith.constant 0 : i32
    %c0_i32_0 = arith.constant 0 : i32
    %c0_i32_1 = arith.constant 0 : i32
    return %c0_i32, %c0_i32_0 : i32, i32
  }
  func.func @transform_3(%arg0: i32) -> (i32, i32) {
    %c0_i32 = arith.constant 0 : i32
    %c0_i32_0 = arith.constant 0 : i32
    %c0_i32_1 = arith.constant 0 : i32
    return %c0_i32, %c0_i32_0 : i32, i32
  }
  func.func @transform_4(%arg0: i32) -> (i32, i32, i32) {
    %c0_i32 = arith.constant 0 : i32
    %c0_i32_0 = arith.constant 0 : i32
    %c0_i32_1 = arith.constant 0 : i32
    return %arg0, %c0_i32, %c0_i32_0 : i32, i32, i32
  }
  func.func @transform_5(%arg0: i32) -> (i32, i32, i32) {
    %c0_i32 = arith.constant 0 : i32
    %c0_i32_0 = arith.constant 0 : i32
    %c0_i32_1 = arith.constant 0 : i32
    return %arg0, %c0_i32, %c0_i32_0 : i32, i32, i32
  }
  func.func @transform_6(%arg0: i32) -> (i32, i32, i32) {
    %c0_i32 = arith.constant 0 : i32
    %c0_i32_0 = arith.constant 0 : i32
    %c0_i32_1 = arith.constant 0 : i32
    return %arg0, %c0_i32, %c0_i32_0 : i32, i32, i32
  }
}

</mosaic_0001>

<llo_original>
// kernel: tpu_custom_call.1
$region0: #{tpu_custom_call.1}
  #allocation0 [shape = 'u32[]', space=smem, size = 0x4, offset = 0x4, fixed_abs, tag = 'smem constant byte address 0x4 - core index']
  #allocation1 [shape = 'u32[144,128]{1,0:T(1,128)}', space=vmem, size = 0x12000, scoped, tag = 'internal scratch']
  #allocation2 [shape = 'f32[20,4]{1,0:T(8,128)}', space=vmem, size = 0x3000, scoped, tag = 'scratch operand']
  %s0 = inlined_call_operand.vmem [shape: f32[2,17,16], index: 0, kind: input, shape index: {}]
  %s1 = inlined_call_operand.vmem [shape: f32[16,256], index: 1, kind: input, shape index: {}]
  %s2 = inlined_call_operand.vmem [shape: f32[256,16], index: 2, kind: input, shape index: {}]
  %s3 = inlined_call_operand.vmem [shape: f32[20,4], index: 3, kind: input, shape index: {}]
  %s4 = inlined_call_operand.vmem [shape: f32[2,17,256], index: 4, kind: output, shape index: {0}]
  %s5 = inlined_call_operand.vmem [shape: f32[2,17,128], index: 5, kind: output, shape index: {1}]
  %s6 = inlined_call_operand.vmem [shape: f32[2,20,4], index: 6, kind: output, shape index: {2}]
  %7 = xla_tuple %s4, %s5, %s6
  %s8 = sld [smem:[#allocation0]]
  $region65: #{tpu_custom_call.1} parent=0
    _
  %s10 = ssub.s32 1, %s8
  %s11 = scalar_select 0, %s10, %s8
  loop: start=0, step=1, limit=4
  $region2: #{tpu_custom_call.1} parent=0 // loop_pre_header
    _
  $region3: #{tpu_custom_call.1} parent=0 // loop_header
    %s13 = sphi 0, %s17
    %p14 = scmp.ge.s32.totalorder %s13, 4
    %s23 = sphi 0, %s25
    %s26 = sphi 0, %s23
    %s27 = sphi 0, %s26
    %s43 = sphi 0, %s27
    %s47 = sphi 0, %s47
    %s49 = sphi 0, %s47
    %s50 = sphi 0, %s49
    %s64 = sphi 0, %s50
    %s68 = sphi 0, %s68
    %s70 = sphi 0, %s68
    %s71 = sphi 0, %s70
    %s85 = sphi 0, %s71
    %s89 = sphi 0, %s89
    %s91 = sphi 0, %s89
    %s92 = sphi 0, %s91
    %s106 = sphi 0, %s92
    %s112 = sphi 0, %s114
    %s115 = sphi 0, %s112
    %s116 = sphi 0, %s115
    %s132 = sphi 0, %s116
    %s138 = sphi 0, %s140
    %s141 = sphi 0, %s138
    %s142 = sphi 0, %s141
    %s158 = sphi 0, %s142
    %s164 = sphi 0, %s166
    %s167 = sphi 0, %s164
    %s168 = sphi 0, %s167
    %s184 = sphi 0, %s168
  $region4: #{tpu_custom_call.1} parent=0 // loop_header_branch
    %16 = sbr.rel (%p14) target = $region8
  $region5: #{tpu_custom_call.1} parent=0 // loop_body
    %s18 = ssub.s32 %s13, 1
    %s19 = ssub.s32 %s13, 2
    %s20 = sadd.s32 %s13, 1
    %s21 = ssub.s32 %s13, %s20
    %p22 = scmp.eq.s32.totalorder %s21, 0
    %s24 = sadd.s32 %s23, 1
    %s25 = scalar_select %p22, %s23, %s24
    %p28 = pneg %p22
    %p29 = scmp.eq.s32.totalorder %s13, 1
    %p30 = por %p28, %p29
    %p31 = scmp.ne.s32.totalorder %s23, %s26
    %p32 = scmp.eq.s32.totalorder %s13, 0
    %p33 = por %p31, %p32
    %p34 = scmp.ne.s32.totalorder %s23, %s26
    %p35 = scmp.eq.s32.totalorder %s18, 1
    %p36 = por %p34, %p35
    %p37 = scmp.ne.s32.totalorder %s26, %s27
    %p38 = scmp.eq.s32.totalorder %s18, 0
    %p39 = por %p37, %p38
    %p40 = scmp.ne.s32.totalorder %s26, %s27
    %p41 = scmp.eq.s32.totalorder %s19, 1
    %p42 = por %p40, %p41
    %p44 = scmp.ne.s32.totalorder %s27, %s43
    %p45 = scmp.eq.s32.totalorder %s19, 0
    %p46 = por %p44, %p45
    %s48 = sadd.s32 %s47, 1
    %p51 = scmp.eq.s32.totalorder %s13, 1
    %p52 = scmp.ne.s32.totalorder %s47, %s49
    %p53 = scmp.eq.s32.totalorder %s13, 0
    %p54 = por %p52, %p53
    %p55 = scmp.ne.s32.totalorder %s47, %s49
    %p56 = scmp.eq.s32.totalorder %s18, 1
    %p57 = por %p55, %p56
    %p58 = scmp.ne.s32.totalorder %s49, %s50
    %p59 = scmp.eq.s32.totalorder %s18, 0
    %p60 = por %p58, %p59
    %p61 = scmp.ne.s32.totalorder %s49, %s50
    %p62 = scmp.eq.s32.totalorder %s19, 1
    %p63 = por %p61, %p62
    %p65 = scmp.ne.s32.totalorder %s50, %s64
    %p66 = scmp.eq.s32.totalorder %s19, 0
    %p67 = por %p65, %p66
    %s69 = sadd.s32 %s68, 1
    %p72 = scmp.eq.s32.totalorder %s13, 1
    %p73 = scmp.ne.s32.totalorder %s68, %s70
    %p74 = scmp.eq.s32.totalorder %s13, 0
    %p75 = por %p73, %p74
    %p76 = scmp.ne.s32.totalorder %s68, %s70
    %p77 = scmp.eq.s32.totalorder %s18, 1
    %p78 = por %p76, %p77
    %p79 = scmp.ne.s32.totalorder %s70, %s71
    %p80 = scmp.eq.s32.totalorder %s18, 0
    %p81 = por %p79, %p80
    %p82 = scmp.ne.s32.totalorder %s70, %s71
    %p83 = scmp.eq.s32.totalorder %s19, 1
    %p84 = por %p82, %p83
    %p86 = scmp.ne.s32.totalorder %s71, %s85
    %p87 = scmp.eq.s32.totalorder %s19, 0
    %p88 = por %p86, %p87
    %s90 = sadd.s32 %s89, 1
    %p93 = scmp.eq.s32.totalorder %s13, 1
    %p94 = scmp.ne.s32.totalorder %s89, %s91
    %p95 = scmp.eq.s32.totalorder %s13, 0
    %p96 = por %p94, %p95
    %p97 = scmp.ne.s32.totalorder %s89, %s91
    %p98 = scmp.eq.s32.totalorder %s18, 1
    %p99 = por %p97, %p98
    %p100 = scmp.ne.s32.totalorder %s91, %s92
    %p101 = scmp.eq.s32.totalorder %s18, 0
    %p102 = por %p100, %p101
    %p103 = scmp.ne.s32.totalorder %s91, %s92
    %p104 = scmp.eq.s32.totalorder %s19, 1
    %p105 = por %p103, %p104
    %p107 = scmp.ne.s32.totalorder %s92, %s106
    %p108 = scmp.eq.s32.totalorder %s19, 0
    %p109 = por %p107, %p108
    %s110 = ssub.s32 %s13, %s20
    %p111 = scmp.eq.s32.totalorder %s110, 0
    %s113 = sadd.s32 %s112, 1
    %s114 = scalar_select %p111, %s112, %s113
    %p117 = pneg %p111
    %p118 = scmp.eq.s32.totalorder %s13, 1
    %p119 = por %p117, %p118
    %p120 = scmp.ne.s32.totalorder %s112, %s115
    %p121 = scmp.eq.s32.totalorder %s13, 0
    %p122 = por %p120, %p121
    %p123 = scmp.ne.s32.totalorder %s112, %s115
    %p124 = scmp.eq.s32.totalorder %s18, 1
    %p125 = por %p123, %p124
    %p126 = scmp.ne.s32.totalorder %s115, %s116
    %p127 = scmp.eq.s32.totalorder %s18, 0
    %p128 = por %p126, %p127
    %p129 = scmp.ne.s32.totalorder %s115, %s116
    %p130 = scmp.eq.s32.totalorder %s19, 1
    %p131 = por %p129, %p130
    %p133 = scmp.ne.s32.totalorder %s116, %s132
    %p134 = scmp.eq.s32.totalorder %s19, 0
    %p135 = por %p133, %p134
    %s136 = ssub.s32 %s13, %s20
    %p137 = scmp.eq.s32.totalorder %s136, 0
    %s139 = sadd.s32 %s138, 1
    %s140 = scalar_select %p137, %s138, %s139
    %p143 = pneg %p137
    %p144 = scmp.eq.s32.totalorder %s13, 1
    %p145 = por %p143, %p144
    %p146 = scmp.ne.s32.totalorder %s138, %s141
    %p147 = scmp.eq.s32.totalorder %s13, 0
    %p148 = por %p146, %p147
    %p149 = scmp.ne.s32.totalorder %s138, %s141
    %p150 = scmp.eq.s32.totalorder %s18, 1
    %p151 = por %p149, %p150
    %p152 = scmp.ne.s32.totalorder %s141, %s142
    %p153 = scmp.eq.s32.totalorder %s18, 0
    %p154 = por %p152, %p153
    %p155 = scmp.ne.s32.totalorder %s141, %s142
    %p156 = scmp.eq.s32.totalorder %s19, 1
    %p157 = por %p155, %p156
    %p159 = scmp.ne.s32.totalorder %s142, %s158
    %p160 = scmp.eq.s32.totalorder %s19, 0
    %p161 = por %p159, %p160
    %s162 = ssub.s32 %s13, %s20
    %p163 = scmp.eq.s32.totalorder %s162, 0
    %s165 = sadd.s32 %s164, 1
    %s166 = scalar_select %p163, %s164, %s165
    %p169 = pneg %p163
    %p170 = scmp.eq.s32.totalorder %s13, 1
    %p171 = por %p169, %p170
    %p172 = scmp.ne.s32.totalorder %s164, %s167
    %p173 = scmp.eq.s32.totalorder %s13, 0
    %p174 = por %p172, %p173
    %p175 = scmp.ne.s32.totalorder %s164, %s167
    %p176 = scmp.eq.s32.totalorder %s18, 1
    %p177 = por %p175, %p176
    %p178 = scmp.ne.s32.totalorder %s167, %s168
    %p179 = scmp.eq.s32.totalorder %s18, 0
    %p180 = por %p178, %p179
    %p181 = scmp.ne.s32.totalorder %s167, %s168
    %p182 = scmp.eq.s32.totalorder %s19, 1
    %p183 = por %p181, %p182
    %p185 = scmp.ne.s32.totalorder %s168, %s184
    %p186 = scmp.eq.s32.totalorder %s19, 0
    %p187 = por %p185, %p186
    %p188 = scmp.le.s32.totalorder 1, %s13
    %p189 = scmp.lt.s32.totalorder %s13, 3
    %p190 = pnand %p188, %p189
    %p191 = pneg %p190
    // Predicated region
    $region9: #{tpu_custom_call.1} parent=5 // pred_check
      _
    $region10: #{tpu_custom_call.1} parent=5 // pred_check_branch
      %193 = sbr.rel (%p190) target = $region12
    $region11: #{tpu_custom_call.1} parent=5 // pred_region
      %s194 = ssub.s32 %s13, 1
      // Predicated region
      $region13: #{tpu_custom_call.1} parent=11 // pred_check
        %p195 = pneg %p60
      $region14: #{tpu_custom_call.1} parent=11 // pred_check_branch
        %197 = sbr.rel (%p195) target = $region16
      $region15: #{tpu_custom_call.1} parent=11 // pred_region
        _
      $region16: #{tpu_custom_call.1} parent=11 // pred_fallthru
        _
      // Predicated region
      $region17: #{tpu_custom_call.1} parent=11 // pred_check
        %p198 = pneg %p81
      $region18: #{tpu_custom_call.1} parent=11 // pred_check_branch
        %200 = sbr.rel (%p198) target = $region20
      $region19: #{tpu_custom_call.1} parent=11 // pred_region
        _
      $region20: #{tpu_custom_call.1} parent=11 // pred_fallthru
        _
      // Predicated region
      $region21: #{tpu_custom_call.1} parent=11 // pred_check
        %p201 = pneg %p102
      $region22: #{tpu_custom_call.1} parent=11 // pred_check_branch
        %203 = sbr.rel (%p201) target = $region24
      $region23: #{tpu_custom_call.1} parent=11 // pred_region
        _
      $region24: #{tpu_custom_call.1} parent=11 // pred_fallthru
        _
    $region12: #{tpu_custom_call.1} parent=5 // pred_fallthru
      _
    %p204 = scmp.lt.s32.totalorder %s13, 2
    // Predicated region
    $region25: #{tpu_custom_call.1} parent=5 // pred_check
      %p205 = pneg %p204
    $region26: #{tpu_custom_call.1} parent=5 // pred_check_branch
      %207 = sbr.rel (%p205) target = $region28
    $region27: #{tpu_custom_call.1} parent=5 // pred_region
      // Predicated region
      $region29: #{tpu_custom_call.1} parent=27 // pred_check
        %p208 = pneg %p33
      $region30: #{tpu_custom_call.1} parent=27 // pred_check_branch
        %210 = sbr.rel (%p208) target = $region32
      $region31: #{tpu_custom_call.1} parent=27 // pred_region
        %p211 = scmp.lt.s32.totalorder %s13, 1
        %s212 = scalar_select %p211, %s13, 1
        %s213 = smul.addr %s212, 3
        %s214 = smul.addr %s213, 8
        %s215 = scalar_lea.vmem %s0, %s214
      $region32: #{tpu_custom_call.1} parent=27 // pred_fallthru
        _
    $region28: #{tpu_custom_call.1} parent=5 // pred_fallthru
      _
    %p216 = scmp.le.s32.totalorder 1, %s13
    %p217 = scmp.lt.s32.totalorder %s13, 3
    %p218 = pnand %p216, %p217
    %p219 = pneg %p218
    // Predicated region
    $region33: #{tpu_custom_call.1} parent=5 // pred_check
      _
    $region34: #{tpu_custom_call.1} parent=5 // pred_check_branch
      %221 = sbr.rel (%p218) target = $region36
    $region35: #{tpu_custom_call.1} parent=5 // pred_region
      %s222 = ssub.s32 %s13, 1
      %p223 = scmp.lt.s32.totalorder %s18, 1
      %s224 = scalar_select %p223, %s18, 1
      %s225 = smul.addr %s224, 3
      %s226 = smul.addr %s225, 8
      %s227 = scalar_lea.vmem %s0, %s226
      %p228 = pneg %p39
      %p229 = pneg %p36
      %p230 = pneg %p60
      %p231 = pneg %p57
      %p232 = pneg %p81
      %p233 = pneg %p78
      %p234 = pneg %p102
      %p235 = pneg %p99
      %p236 = pneg %p128
      %p237 = pneg %p125
      %p238 = scmp.lt.s32.totalorder %s18, 1
      %s239 = scalar_select %p238, %s18, 1
      %s240 = smul.addr %s239, 6
      %s241 = smul.addr %s240, 8
      %s242 = scalar_lea.vmem %s4, %s241
      %p243 = pneg %p154
      %p244 = pneg %p151
      %p245 = scmp.lt.s32.totalorder %s18, 1
      %s246 = scalar_select %p245, %s18, 1
      %s247 = smul.addr %s246, 3
      %s248 = smul.addr %s247, 8
      %s249 = scalar_lea.vmem %s5, %s248
      %p250 = pneg %p180
      %p251 = pneg %p177
      %p252 = scmp.lt.s32.totalorder %s18, 1
      %s253 = scalar_select %p252, %s18, 1
      %s254 = smul.addr %s253, 3
      %s255 = smul.addr %s254, 8
      %s256 = scalar_lea.vmem %s6, %s255
      %p257 = scmp.lt.s32.totalorder %s18, 1
      %s258 = scalar_select %p257, %s18, 1
      %s259 = smul.addr %s258, 3
      %s260 = smul.addr %s259, 8
      %s261 = scalar_lea.vmem %s0, %s260
      %p262 = scmp.lt.s32.totalorder %s18, 1
      %s263 = scalar_select %p262, %s18, 1
      %s264 = smul.addr %s263, 6
      %s265 = smul.addr %s264, 8
      %s266 = scalar_lea.vmem %s4, %s265
      %p267 = scmp.lt.s32.totalorder %s18, 1
      %s268 = scalar_select %p267, %s18, 1
      %s269 = smul.addr %s268, 3
      %s270 = smul.addr %s269, 8
      %s271 = scalar_lea.vmem %s5, %s270
      %p272 = scmp.lt.s32.totalorder %s18, 1
      %s273 = scalar_select %p272, %s18, 1
      %s274 = smul.addr %s273, 3
      %s275 = smul.addr %s274, 8
      %s276 = scalar_lea.vmem %s6, %s275
      %v277 = vld [vmem:[%s261] sm:$0xff]
      %v278 = vld [vmem:[%s261 + $0x8] sm:$0xff]
      %v279 = vld [vmem:[%s261 + $0x10] sm:$0x1]
      %v280 = vld [vmem:[%s1] sm:$0xff]
      %v281 = vld [vmem:[%s1 + $0x8] sm:$0xff]
      %v282 = vld [vmem:[%s1 + $0x10] sm:$0xff]
      %v283 = vld [vmem:[%s1 + $0x18] sm:$0xff]
      %vm284 = vcmask 130048
      %v286 = vsel %vm284, %v277, 0
      %v289 = vsel %vm284, %v278, 0
      %v292 = vsel %vm284, %v279, 0
      %294 = vmatprep.subr.mxu0 0.0
      %295 = vmatpush1.msra.mxu0 0.0
      %296 = vmatprep.subr.mxu0 0.0
      %297 = vmatpush1.msra.mxu0 0.0
      %298 = vmatprep.subr.mxu0 0.0
      %299 = vmatpush1.msra.mxu0 0.0
      %300 = vmatprep.subr.mxu0 0.0
      %301 = vmatpush1.msra.mxu0 0.0
      %302 = vmatprep.subr.mxu0 0.0
      %303 = vmatpush1.msra.mxu0 0.0
      %304 = vmatprep.subr.mxu0 0.0
      %305 = vmatpush1.msra.mxu0 0.0
      %306 = vmatprep.subr.mxu0 0.0
      %307 = vmatpush1.msra.mxu0 0.0
      %308 = vmatprep.subr.mxu0 0.0
      %309 = vmatpush1.msra.mxu0 0.0
      %310 = vmatprep.subr.mxu0 0.0
      %311 = vmatpush1.msra.mxu0 0.0
      %312 = vmatprep.subr.mxu0 0.0
      %313 = vmatpush1.msra.mxu0 0.0
      %314 = vmatprep.subr.mxu0 0.0
      %315 = vmatpush1.msra.mxu0 0.0
      %316 = vmatprep.subr.mxu0 0.0
      %317 = vmatpush1.msra.mxu0 0.0
      %318 = vmatprep.subr.mxu0 0.0
      %319 = vmatpush1.msra.mxu0 0.0
      %320 = vmatprep.subr.mxu0 0.0
      %321 = vmatpush1.msra.mxu0 0.0
      %322 = vmatprep.subr.mxu0 %v283
      %323 = vmatpush1.msra.mxu0 %v282
      %324 = vmatprep.subr.mxu0 %v281
      %325 = vmatpush1.msra.mxu0 %v280
      %326 = vmatprep.subr.mxu0 0.0
      %327 = vmatpush2.msra.mxu0 0.0
      %328 = vmatprep.subr.mxu0 0.0
      %329 = vmatpush2.msra.mxu0 0.0
      %330 = vmatprep.subr.mxu0 0.0
      %331 = vmatpush2.msra.mxu0 0.0
      %332 = vmatprep.subr.mxu0 0.0
      %333 = vmatpush2.msra.mxu0 0.0
      %334 = vmatprep.subr.mxu0 0.0
      %335 = vmatpush2.msra.mxu0 0.0
      %336 = vmatprep.subr.mxu0 0.0
      %337 = vmatpush2.msra.mxu0 0.0
      %338 = vmatprep.subr.mxu0 0.0
      %339 = vmatpush2.msra.mxu0 0.0
      %340 = vmatprep.subr.mxu0 0.0
      %341 = vmatpush2.msra.mxu0 0.0
      %342 = vmatprep.subr.mxu0 0.0
      %343 = vmatpush2.msra.mxu0 0.0
      %344 = vmatprep.subr.mxu0 0.0
      %345 = vmatpush2.msra.mxu0 0.0
      %346 = vmatprep.subr.mxu0 0.0
      %347 = vmatpush2.msra.mxu0 0.0
      %348 = vmatprep.subr.mxu0 0.0
      %349 = vmatpush2.msra.mxu0 0.0
      %350 = vmatprep.subr.mxu0 0.0
      %351 = vmatpush2.msra.mxu0 0.0
      %352 = vmatprep.subr.mxu0 0.0
      %353 = vmatpush2.msra.mxu0 0.0
      %354 = vmatprep.subr.mxu0 0.0
      %355 = vmatpush2.msra.mxu0 0.0
      %356 = vmatprep.subr.mxu0 0.0
      %357 = vmatpush2.msra.mxu0 0.0
      %358 = vmatprep.mubr.f32.mxu0 0.0
      %359 = vmatmul.mubr.f32.gmra.mxu0 %v286
      %v360 = vpop.f32.mrf.mxu0
      %v361 = vadd.f32 0.0, %v360
      %v362 = vpop.f32.mrf.mxu0
      %v363 = vadd.f32 0.0, %v362
      %364 = vmatprep.mubr.f32.mxu0 0.0
      %365 = vmatmul.mubr.f32.gmra.mxu0 %v289
      %v366 = vpop.f32.mrf.mxu0
      %v367 = vadd.f32 0.0, %v366
      %v368 = vpop.f32.mrf.mxu0
      %v369 = vadd.f32 0.0, %v368
      %370 = vmatprep.mubr.f32.mxu0 0.0
      %371 = vmatmul.mubr.f32.gmra.mxu0 %v292
      %v372 = vpop.f32.mrf.mxu0
      %v373 = vadd.f32 0.0, %v372
      %v374 = vpop.f32.mrf.mxu0
      %v375 = vadd.f32 0.0, %v374
      %376 = vdwg.mxu0
      %377 = vst [vmem:[%s266] sm:$0xff] %v361
      %378 = vst [vmem:[%s266 + $0x8] sm:$0xff] %v363
      %379 = vst [vmem:[%s266 + $0x10] sm:$0xff] %v367
      %380 = vst [vmem:[%s266 + $0x18] sm:$0xff] %v369
      %381 = vst [vmem:[%s266 + $0x20] sm:$0x1] %v373
      %382 = vst [vmem:[%s266 + $0x28] sm:$0x1] %v375
      %v383 = vmul.f32 %v361, %v361
      %v384 = vmul.f32 %v367, %v367
      %v385 = vmul.f32 %v373, %v373
      %v386 = vmul.f32 %v363, %v363
      %v387 = vmul.f32 %v369, %v369
      %v388 = vmul.f32 %v375, %v375
      %v389 = vadd.f32 %v383, %v386
      %v390 = vadd.f32 %v384, %v387
      %v391 = vadd.f32 %v385, %v388
      %v392 = vrsqrt.pop %v389
      %v393 = vmul.f32 %v389, %v392
      %vm394 = vcmp.eq.f32.partialorder %v389, inf
      %v395 = vsel %vm394, %v389, %v393
      %vm396 = vcmp.eq.f32.partialorder %v389, 0.0
      %v397 = vand.u32 %v389, 2147483648
      %v398 = vsel %vm396, %v397, %v395
      %v399 = vrsqrt.pop %v390
      %v400 = vmul.f32 %v390, %v399
      %vm401 = vcmp.eq.f32.partialorder %v390, inf
      %v402 = vsel %vm401, %v390, %v400
      %vm403 = vcmp.eq.f32.partialorder %v390, 0.0
      %v404 = vand.u32 %v390, 2147483648
      %v405 = vsel %vm403, %v404, %v402
      %v406 = vrsqrt.pop %v391
      %v407 = vmul.f32 %v391, %v406
      %vm408 = vcmp.eq.f32.partialorder %v391, inf
      %v409 = vsel %vm408, %v391, %v407
      %vm410 = vcmp.eq.f32.partialorder %v391, 0.0
      %v411 = vand.u32 %v391, 2147483648
      %v412 = vsel %vm410, %v411, %v409
      %413 = vst [vmem:[%s271] sm:$0xff] %v398
      %414 = vst [vmem:[%s271 + $0x8] sm:$0xff] %v405
      %415 = vst [vmem:[%s271 + $0x10] sm:$0x1] %v412
      %v416 = vld [vmem:[%s2] sm:$0xff]
      %v417 = vld [vmem:[%s2 + $0x8] sm:$0xff]
      %v418 = vld [vmem:[%s2 + $0x10] sm:$0xff]
      %v419 = vld [vmem:[%s2 + $0x18] sm:$0xff]
      %v420 = vld [vmem:[%s2 + $0x20] sm:$0xff]
      %v421 = vld [vmem:[%s2 + $0x28] sm:$0xff]
      %v422 = vld [vmem:[%s2 + $0x30] sm:$0xff]
      %v423 = vld [vmem:[%s2 + $0x38] sm:$0xff]
      %v424 = vld [vmem:[%s2 + $0x40] sm:$0xff]
      %v425 = vld [vmem:[%s2 + $0x48] sm:$0xff]
      %v426 = vld [vmem:[%s2 + $0x50] sm:$0xff]
      %v427 = vld [vmem:[%s2 + $0x58] sm:$0xff]
      %v428 = vld [vmem:[%s2 + $0x60] sm:$0xff]
      %v429 = vld [vmem:[%s2 + $0x68] sm:$0xff]
      %v430 = vld [vmem:[%s2 + $0x70] sm:$0xff]
      %v431 = vld [vmem:[%s2 + $0x78] sm:$0xff]
      %v432 = vld [vmem:[%s2 + $0x80] sm:$0xff]
      %v433 = vld [vmem:[%s2 + $0x88] sm:$0xff]
      %v434 = vld [vmem:[%s2 + $0x90] sm:$0xff]
      %v435 = vld [vmem:[%s2 + $0x98] sm:$0xff]
      %v436 = vld [vmem:[%s2 + $0xa0] sm:$0xff]
      %v437 = vld [vmem:[%s2 + $0xa8] sm:$0xff]
      %v438 = vld [vmem:[%s2 + $0xb0] sm:$0xff]
      %v439 = vld [vmem:[%s2 + $0xb8] sm:$0xff]
      %v440 = vld [vmem:[%s2 + $0xc0] sm:$0xff]
      %v441 = vld [vmem:[%s2 + $0xc8] sm:$0xff]
      %v442 = vld [vmem:[%s2 + $0xd0] sm:$0xff]
      %v443 = vld [vmem:[%s2 + $0xd8] sm:$0xff]
      %v444 = vld [vmem:[%s2 + $0xe0] sm:$0xff]
      %v445 = vld [vmem:[%s2 + $0xe8] sm:$0xff]
      %v446 = vld [vmem:[%s2 + $0xf0] sm:$0xff]
      %v447 = vld [vmem:[%s2 + $0xf8] sm:$0xff]
      %448 = vmatprep.subr.mxu0 0.0
      %449 = vmatpush1.msra.mxu0 %v431
      %450 = vmatprep.subr.mxu0 0.0
      %451 = vmatpush1.msra.mxu0 %v430
      %452 = vmatprep.subr.mxu0 0.0
      %453 = vmatpush1.msra.mxu0 %v429
      %454 = vmatprep.subr.mxu0 0.0
      %455 = vmatpush1.msra.mxu0 %v428
      %456 = vmatprep.subr.mxu0 0.0
      %457 = vmatpush1.msra.mxu0 %v427
      %458 = vmatprep.subr.mxu0 0.0
      %459 = vmatpush1.msra.mxu0 %v426
      %460 = vmatprep.subr.mxu0 0.0
      %461 = vmatpush1.msra.mxu0 %v425
      %462 = vmatprep.subr.mxu0 0.0
      %463 = vmatpush1.msra.mxu0 %v424
      %464 = vmatprep.subr.mxu0 0.0
      %465 = vmatpush1.msra.mxu0 %v423
      %466 = vmatprep.subr.mxu0 0.0
      %467 = vmatpush1.msra.mxu0 %v422
      %468 = vmatprep.subr.mxu0 0.0
      %469 = vmatpush1.msra.mxu0 %v421
      %470 = vmatprep.subr.mxu0 0.0
      %471 = vmatpush1.msra.mxu0 %v420
      %472 = vmatprep.subr.mxu0 0.0
      %473 = vmatpush1.msra.mxu0 %v419
      %474 = vmatprep.subr.mxu0 0.0
      %475 = vmatpush1.msra.mxu0 %v418
      %476 = vmatprep.subr.mxu0 0.0
      %477 = vmatpush1.msra.mxu0 %v417
      %478 = vmatprep.subr.mxu0 0.0
      %479 = vmatpush1.msra.mxu0 %v416
      %480 = vmatprep.subr.mxu0 0.0
      %481 = vmatpush2.msra.mxu0 %v447
      %482 = vmatprep.subr.mxu0 0.0
      %483 = vmatpush2.msra.mxu0 %v446
      %484 = vmatprep.subr.mxu0 0.0
      %485 = vmatpush2.msra.mxu0 %v445
      %486 = vmatprep.subr.mxu0 0.0
      %487 = vmatpush2.msra.mxu0 %v444
      %488 = vmatprep.subr.mxu0 0.0
      %489 = vmatpush2.msra.mxu0 %v443
      %490 = vmatprep.subr.mxu0 0.0
      %491 = vmatpush2.msra.mxu0 %v442
      %492 = vmatprep.subr.mxu0 0.0
      %493 = vmatpush2.msra.mxu0 %v441
      %494 = vmatprep.subr.mxu0 0.0
      %495 = vmatpush2.msra.mxu0 %v440
      %496 = vmatprep.subr.mxu0 0.0
      %497 = vmatpush2.msra.mxu0 %v439
      %498 = vmatprep.subr.mxu0 0.0
      %499 = vmatpush2.msra.mxu0 %v438
      %500 = vmatprep.subr.mxu0 0.0
      %501 = vmatpush2.msra.mxu0 %v437
      %502 = vmatprep.subr.mxu0 0.0
      %503 = vmatpush2.msra.mxu0 %v436
      %504 = vmatprep.subr.mxu0 0.0
      %505 = vmatpush2.msra.mxu0 %v435
      %506 = vmatprep.subr.mxu0 0.0
      %507 = vmatpush2.msra.mxu0 %v434
      %508 = vmatprep.subr.mxu0 0.0
      %509 = vmatpush2.msra.mxu0 %v433
      %510 = vmatprep.subr.mxu0 0.0
      %511 = vmatpush2.msra.mxu0 %v432
      %512 = vmatprep.mubr.f32.mxu0 %v363
      %513 = vmatmul.mubr.f32.gmra.mxu0 %v361
      %v514 = vpop.f32.mrf.mxu0
      %v515 = vadd.f32 0.0, %v514
      %v516 = vpop.f32.mrf.mxu0
      %517 = vmatprep.mubr.f32.mxu0 %v369
      %518 = vmatmul.mubr.f32.gmra.mxu0 %v367
      %v519 = vpop.f32.mrf.mxu0
      %v520 = vadd.f32 0.0, %v519
      %v521 = vpop.f32.mrf.mxu0
      %522 = vmatprep.mubr.f32.mxu0 %v375
      %523 = vmatmul.mubr.f32.gmra.mxu0 %v373
      %v524 = vpop.f32.mrf.mxu0
      %v525 = vadd.f32 0.0, %v524
      %v526 = vpop.f32.mrf.mxu0
      %527 = vdwg.mxu0
      %vm528 = vcmask 31744
      %529 = vst.msk [vmem:[#allocation2] sm:$0xff] %vm528, 0.0
      %530 = vst.msk [vmem:[#allocation2 + $0x8] sm:$0xff] %vm528, 0.0
      %vm531 = vcmask 27648
      %532 = vst.msk [vmem:[#allocation2 + $0x10] sm:$0xf] %vm531, 0.0
      %v533 = vld [vmem:[#allocation2] sm:$0xff]
      %v534 = vld [vmem:[#allocation2 + $0x8] sm:$0xff]
      %v535 = vld [vmem:[#allocation2 + $0x10] sm:$0x1]
      %v536 = vadd.f32 %v533, %v515
      %v537 = vadd.f32 %v534, %v520
      %v538 = vadd.f32 %v535, %v525
      %539 = vst.msk [vmem:[#allocation2] sm:$0xff] %vm528, %v536
      %540 = vst.msk [vmem:[#allocation2 + $0x8] sm:$0xff] %vm528, %v537
      %vm541 = vcmask 24576
      %542 = vst.msk [vmem:[#allocation2 + $0x10] sm:$0x1] %vm541, %v538
      %v543 = vld [vmem:[#allocation2 + $0x1] sm:$0xff]
      %v544 = vld [vmem:[#allocation2 + $0x9] sm:$0xff]
      %v545 = vld [vmem:[#allocation2 + $0x11] sm:$0x1]
      %549 = vrot.lane.b32.xlu0 %v515, 124
      %v550 = vpop.permute.xlu0 %549
      %551 = vrot.lane.b32.xlu0 %v520, 124
      %v552 = vpop.permute.xlu0 %551
      %553 = vrot.lane.b32.xlu0 %v525, 124
      %v554 = vpop.permute.xlu0 %553
      %v558 = vadd.f32 %v543, %v550
      %v559 = vadd.f32 %v544, %v552
      %v560 = vadd.f32 %v545, %v554
      %561 = vst.msk [vmem:[#allocation2 + $0x1] sm:$0xff] %vm528, %v558
      %562 = vst.msk [vmem:[#allocation2 + $0x9] sm:$0xff] %vm528, %v559
      %563 = vst.msk [vmem:[#allocation2 + $0x11] sm:$0x1] %vm541, %v560
      %v564 = vld [vmem:[#allocation2 + $0x2] sm:$0xff]
      %v565 = vld [vmem:[#allocation2 + $0xa] sm:$0xff]
      %v566 = vld [vmem:[#allocation2 + $0x12] sm:$0x1]
      %567 = vrot.lane.b32.xlu0 %v515, 120
      %v568 = vpop.permute.xlu0 %567
      %569 = vrot.lane.b32.xlu0 %v520, 120
      %v570 = vpop.permute.xlu0 %569
      %571 = vrot.lane.b32.xlu0 %v525, 120
      %v572 = vpop.permute.xlu0 %571
      %v576 = vadd.f32 %v564, %v568
      %v577 = vadd.f32 %v565, %v570
      %v578 = vadd.f32 %v566, %v572
      %579 = vst.msk [vmem:[#allocation2 + $0x2] sm:$0xff] %vm528, %v576
      %580 = vst.msk [vmem:[#allocation2 + $0xa] sm:$0xff] %vm528, %v577
      %581 = vst.msk [vmem:[#allocation2 + $0x12] sm:$0x1] %vm541, %v578
      %v582 = vld [vmem:[#allocation2 + $0x3] sm:$0xff]
      %v583 = vld [vmem:[#allocation2 + $0xb] sm:$0xff]
      %v584 = vld [vmem:[#allocation2 + $0x13] sm:$0x1]
      %585 = vrot.lane.b32.xlu0 %v515, 116
      %v586 = vpop.permute.xlu0 %585
      %587 = vrot.lane.b32.xlu0 %v520, 116
      %v588 = vpop.permute.xlu0 %587
      %589 = vrot.lane.b32.xlu0 %v525, 116
      %v590 = vpop.permute.xlu0 %589
      %v594 = vadd.f32 %v582, %v586
      %v595 = vadd.f32 %v583, %v588
      %v596 = vadd.f32 %v584, %v590
      %597 = vst.msk [vmem:[#allocation2 + $0x3] sm:$0xff] %vm528, %v594
      %598 = vst.msk [vmem:[#allocation2 + $0xb] sm:$0xff] %vm528, %v595
      %599 = vst.msk [vmem:[#allocation2 + $0x13] sm:$0x1] %vm541, %v596
      %v600 = vld [vmem:[#allocation2] sm:$0xff]
      %v601 = vld [vmem:[#allocation2 + $0x8] sm:$0xff]
      %v602 = vld [vmem:[#allocation2 + $0x10] sm:$0xf]
      %v603 = vld [vmem:[%s3] sm:$0xff]
      %v604 = vld [vmem:[%s3 + $0x8] sm:$0xff]
      %v605 = vld [vmem:[%s3 + $0x10] sm:$0xf]
      %v606 = vmul.f32 %v600, %v603
      %v607 = vmul.f32 %v601, %v604
      %v608 = vmul.f32 %v602, %v605
      %609 = vst.msk [vmem:[%s276] sm:$0xff] %vm528, %v606
      %610 = vst.msk [vmem:[%s276 + $0x8] sm:$0xff] %vm528, %v607
      %611 = vst.msk [vmem:[%s276 + $0x10] sm:$0xf] %vm531, %v608
      %p612 = scmp.lt.s32.totalorder %s18, 1
      %s613 = scalar_select %p612, %s18, 1
      %s614 = smul.addr %s613, 6
      %s615 = smul.addr %s614, 8
      %s616 = scalar_lea.vmem %s4, %s615
      %p617 = scmp.lt.s32.totalorder %s18, 1
      %s618 = scalar_select %p617, %s18, 1
      %s619 = smul.addr %s618, 3
      %s620 = smul.addr %s619, 8
      %s621 = scalar_lea.vmem %s5, %s620
      %p622 = scmp.lt.s32.totalorder %s18, 1
      %s623 = scalar_select %p622, %s18, 1
      %s624 = smul.addr %s623, 3
      %s625 = smul.addr %s624, 8
      %s626 = scalar_lea.vmem %s6, %s625
      // Predicated region
      $region37: #{tpu_custom_call.1} parent=35 // pred_check
        %p627 = pneg %p125
      $region38: #{tpu_custom_call.1} parent=35 // pred_check_branch
        %629 = sbr.rel (%p627) target = $region40
      $region39: #{tpu_custom_call.1} parent=35 // pred_region
        _
      $region40: #{tpu_custom_call.1} parent=35 // pred_fallthru
        _
      // Predicated region
      $region41: #{tpu_custom_call.1} parent=35 // pred_check
        %p630 = pneg %p151
      $region42: #{tpu_custom_call.1} parent=35 // pred_check_branch
        %632 = sbr.rel (%p630) target = $region44
      $region43: #{tpu_custom_call.1} parent=35 // pred_region
        _
      $region44: #{tpu_custom_call.1} parent=35 // pred_fallthru
        _
      // Predicated region
      $region45: #{tpu_custom_call.1} parent=35 // pred_check
        %p633 = pneg %p177
      $region46: #{tpu_custom_call.1} parent=35 // pred_check_branch
        %635 = sbr.rel (%p633) target = $region48
      $region47: #{tpu_custom_call.1} parent=35 // pred_region
        _
      $region48: #{tpu_custom_call.1} parent=35 // pred_fallthru
        _
    $region36: #{tpu_custom_call.1} parent=5 // pred_fallthru
      _
    %p636 = scmp.le.s32.totalorder 2, %s13
    // Predicated region
    $region49: #{tpu_custom_call.1} parent=5 // pred_check
      %p637 = pneg %p636
    $region50: #{tpu_custom_call.1} parent=5 // pred_check_branch
      %639 = sbr.rel (%p637) target = $region52
    $region51: #{tpu_custom_call.1} parent=5 // pred_region
      %s640 = ssub.s32 %s13, 2
      // Predicated region
      $region53: #{tpu_custom_call.1} parent=51 // pred_check
        %p641 = pneg %p131
      $region54: #{tpu_custom_call.1} parent=51 // pred_check_branch
        %643 = sbr.rel (%p641) target = $region56
      $region55: #{tpu_custom_call.1} parent=51 // pred_region
        %p644 = scmp.lt.s32.totalorder %s19, 1
        %s645 = scalar_select %p644, %s19, 1
        %s646 = smul.addr %s645, 6
        %s647 = smul.addr %s646, 8
        %s648 = scalar_lea.vmem %s4, %s647
      $region56: #{tpu_custom_call.1} parent=51 // pred_fallthru
        _
      // Predicated region
      $region57: #{tpu_custom_call.1} parent=51 // pred_check
        %p649 = pneg %p157
      $region58: #{tpu_custom_call.1} parent=51 // pred_check_branch
        %651 = sbr.rel (%p649) target = $region60
      $region59: #{tpu_custom_call.1} parent=51 // pred_region
        %p652 = scmp.lt.s32.totalorder %s19, 1
        %s653 = scalar_select %p652, %s19, 1
        %s654 = smul.addr %s653, 3
        %s655 = smul.addr %s654, 8
        %s656 = scalar_lea.vmem %s5, %s655
      $region60: #{tpu_custom_call.1} parent=51 // pred_fallthru
        _
      // Predicated region
      $region61: #{tpu_custom_call.1} parent=51 // pred_check
        %p657 = pneg %p183
      $region62: #{tpu_custom_call.1} parent=51 // pred_check_branch
        %659 = sbr.rel (%p657) target = $region64
      $region63: #{tpu_custom_call.1} parent=51 // pred_region
        %p660 = scmp.lt.s32.totalorder %s19, 1
        %s661 = scalar_select %p660, %s19, 1
        %s662 = smul.addr %s661, 3
        %s663 = smul.addr %s662, 8
        %s664 = scalar_lea.vmem %s6, %s663
      $region64: #{tpu_custom_call.1} parent=51 // pred_fallthru
        _
    $region52: #{tpu_custom_call.1} parent=5 // pred_fallthru
      _
  $region6: #{tpu_custom_call.1} parent=0 // loop_footer
    %s17 = sadd.s32 1, %s13
  $region7: #{tpu_custom_call.1} parent=0 // loop_footer_branch
    %12 = sbr.rel target = $region3
  $region8: #{tpu_custom_call.1} parent=0 // loop_exit
    _

</llo_original>
